<compile_context>
chip_gen: v7x
topology: tpu7x:2x2x1
jax: 0.10.0
libtpu: 0.0.40
codegen_flags: <defaults>
</compile_context>

<pallas_src>
import functools

import jax
import jax.numpy as jnp
from jax.experimental import pallas as pl
from jax.experimental.pallas import tpu as pltpu


def _round_up(a, b):
    return (a + b - 1) // b * b


def _dft_kernel(fp, x_ref, c_ref, ct_ref, w_ref, o_ref):
    """One batch tile of the DFT season/trend decomposition.

    x_ref : (TB, L)     f32   input rows for this tile
    c_ref : (L, 2*Fp)   bf16  [cos | -sin] forward real-DFT matrix (padded bins = 0)
    ct_ref: (2*Fp, L)   bf16  transpose of c_ref, host-precomputed
    w_ref : (1, 2*Fp)   f32   irfft weights w/L (1 at DC/Nyquist, 2 else, 0 on pads)
    o_ref : (TB, L)     f32   output tile
    """
    x = x_ref[...]                                               # (TB, L) f32

    # --- rfft via ONE fused MXU matmul: [Re | Im] = x @ [cr | ci] ------------
    xf = jnp.dot(x.astype(jnp.bfloat16), c_ref[...],
                 preferred_element_type=jnp.float32)             # (TB, 2*Fp) f32
    xr = xf[:, :fp]
    xi = xf[:, fp:]
    freq2 = xr * xr + xi * xi                                    # |xf|^2 (no sqrt needed)

    # `freq[0] = 0` zeroes the whole first batch row of the 2-D freq array, so
    # the global top-k threshold is identically 0 and "freq <= thr" is just
    # "freq == 0".  Zero row 0 (only in the first grid block) and keep strictly
    # positive magnitudes; padded frequency bins have freq2 == 0 and drop out.
    tile_rows = jax.lax.broadcasted_iota(jnp.int32, freq2.shape, 0)
    is_global_row0 = jnp.logical_and(tile_rows == 0, pl.program_id(0) == 0)
    freq2 = jnp.where(is_global_row0, 0.0, freq2)

    keep = (freq2 > 0.0).astype(jnp.float32)                     # (TB, Fp)
    gate = jnp.concatenate([keep, keep], axis=-1) * w_ref[...]   # mask + w/L in one pass
    xf_w = xf * gate                                             # (TB, 2*Fp)

    # --- irfft via ONE plain MXU matmul against the pre-transposed matrix ----
    x_season = jnp.dot(xf_w.astype(jnp.bfloat16), ct_ref[...],
                       preferred_element_type=jnp.float32)       # (TB, L) f32

    x_trend = x - x_season
    o_ref[...] = (x + x_season + x_trend).astype(o_ref.dtype)


def _two_x_kernel(x_ref, o_ref):
    # out = x + x_season + (x - x_season) == 2*x (exact in real arithmetic).
    o_ref[...] = (x_ref[...] * 2.0).astype(o_ref.dtype)


def dft_forward(x, top_k, *, fold_to_2x=False, batch_tile=None):
    """Pallas implementation of DFT.forward for 2-D x of shape (B, L), L even."""
    B, L = x.shape
    assert L % 2 == 0, "irfft default length requires even L to round-trip"
    assert top_k >= 1

    if fold_to_2x:
        # Review item #1: the whole pipeline collapses to 2*x; pure copy kernel.
        TB = min(_round_up(B, 8), 512)
        B_pad = _round_up(B, TB)
        x_in = jnp.pad(x, ((0, B_pad - B), (0, 0))) if B_pad != B else x
        out = pl.pallas_call(
            _two_x_kernel,
            out_shape=jax.ShapeDtypeStruct((B_pad, L), x.dtype),
            grid=(B_pad // TB,),
            in_specs=[pl.BlockSpec((TB, L), lambda i: (i, 0))],
            out_specs=pl.BlockSpec((TB, L), lambda i: (i, 0)),
            compiler_params=pltpu.CompilerParams(
                dimension_semantics=("parallel",)),
        )(x_in)
        return out[:B]

    F = L // 2 + 1
    Fp = _round_up(F, 128)              # lane-dense / MXU-clean frequency axis

    # Batch tile: multiple of 16 (bf16 sublane packing); up to 256 rows so the
    # MXU M dimension is filled on v6e/v7x (>=128 already fills v5e's array).
    if batch_tile is None:
        TB = min(_round_up(B, 16), 256)
    else:
        TB = _round_up(batch_tile, 16)
    B_pad = _round_up(B, TB)
    x_in = jnp.pad(x, ((0, B_pad - B), (0, 0))) if B_pad != B else x

    # Forward real-DFT matrix C = [cr | ci] of shape (L, 2*Fp):
    #   Re = x @ cr, Im = x @ ci   (cr = cos, ci = -sin; padded bins zeroed).
    n = jnp.arange(L, dtype=jnp.float32)[:, None]
    k = jnp.arange(Fp, dtype=jnp.float32)[None, :]
    ang = 2.0 * jnp.pi * n * k / L
    valid = (jnp.arange(Fp) < F)[None, :]
    cr = jnp.where(valid, jnp.cos(ang), 0.0)
    ci = jnp.where(valid, -jnp.sin(ang), 0.0)
    # DC / Nyquist bins of a real signal have exactly zero imaginary part.
    ci = ci.at[:, 0].set(0.0).at[:, L // 2].set(0.0)
    C_f32 = jnp.concatenate([cr, ci], axis=1)                   # (L, 2*Fp)
    C = C_f32.astype(jnp.bfloat16)
    Ct = C_f32.T.astype(jnp.bfloat16)                           # (2*Fp, L) host transpose

    # Inverse weights w/L (1 at DC/Nyquist, 2 elsewhere, 0 on padded bins),
    # duplicated for the real and imaginary halves.
    kidx = jnp.arange(Fp)
    w = jnp.where((kidx == 0) | (kidx == L // 2), 1.0, 2.0) / L
    w = jnp.where(kidx < F, w, 0.0).astype(jnp.float32)
    wfull = jnp.concatenate([w, w])[None, :]                    # (1, 2*Fp)

    # VMEM budget from actual buffer bytes (+25% headroom), 16 MiB floor.
    const_bytes = 2 * (L * 2 * Fp * 2) + 2 * Fp * 4             # C + Ct (bf16), w (f32)
    tile_bytes = 2 * 2 * (TB * L * 4)                           # x + out, double-buffered
    interm_bytes = TB * 2 * Fp * (3 * 4 + 2) + 3 * TB * L * 4   # xf/freq2/gate + season etc.
    vmem_bytes = int(1.25 * (2 * const_bytes + tile_bytes + interm_bytes))
    vmem_bytes = max(vmem_bytes, 16 * 1024 * 1024)

    kernel = functools.partial(_dft_kernel, Fp)
    out = pl.pallas_call(
        kernel,
        out_shape=jax.ShapeDtypeStruct((B_pad, L), x.dtype),
        grid=(B_pad // TB,),
        in_specs=[
            pl.BlockSpec((TB, L), lambda i: (i, 0)),            # x: one batch tile / step
            pl.BlockSpec((L, 2 * Fp), lambda i: (0, 0)),        # C : constant block, fetched once
            pl.BlockSpec((2 * Fp, L), lambda i: (0, 0)),        # Ct: constant block, fetched once
            pl.BlockSpec((1, 2 * Fp), lambda i: (0, 0)),        # w
        ],
        out_specs=pl.BlockSpec((TB, L), lambda i: (i, 0)),
        compiler_params=pltpu.CompilerParams(
            dimension_semantics=("parallel",),                  # megacore on v7x
            vmem_limit_bytes=vmem_bytes),
    )(x_in, C, Ct, wfull)
    return out[:B]


def dft_reference(x, top_k):
    """Pure-JAX reference mirroring the PyTorch module exactly."""
    xf = jnp.fft.rfft(x, axis=-1)
    freq = jnp.abs(xf)
    freq = freq.at[0].set(0.0)
    top_k_freq, _ = jax.lax.top_k(freq, top_k)
    thr = jnp.min(top_k_freq)
    xf = jnp.where(freq <= thr, 0.0 + 0.0j, xf)
    x_season = jnp.fft.irfft(xf, axis=-1)
    x_trend = x - x_season
    return x + x_season + x_trend


if __name__ == "__main__":
    B, L = 8, 32
    TOP_K = 3

    key = jax.random.PRNGKey(0)
    x = jax.random.normal(key, (B, L), dtype=jnp.float32)

    ref = dft_reference(x, TOP_K)

    # Faithful FFT path.
    out = jax.block_until_ready(dft_forward(x, TOP_K))
    assert out.shape == ref.shape and out.dtype == ref.dtype
    assert jnp.allclose(out, ref, atol=1e-3, rtol=1e-3), (
        f"max abs err = {jnp.max(jnp.abs(out - ref))}")

    # Optional fast path (out == 2*x algebraically).
    out_fast = jax.block_until_ready(dft_forward(x, TOP_K, fold_to_2x=True))
    assert jnp.allclose(out_fast, ref, atol=1e-3, rtol=1e-3), (
        f"max abs err (2x path) = {jnp.max(jnp.abs(out_fast - ref))}")

    print("KERNEL_OK")
</pallas_src>

<mosaic_0001>
module attributes {stable_mosaic.version = 11 : i64} {
  func.func @_dft_kernel(%arg0: i32, %arg1: memref<16x32xf32, #tpu.memory_space<vmem>>, %arg2: memref<32x256xbf16, #tpu.memory_space<vmem>>, %arg3: memref<256x32xbf16, #tpu.memory_space<vmem>>, %arg4: memref<1x256xf32, #tpu.memory_space<vmem>>, %arg5: memref<16x32xf32, #tpu.memory_space<vmem>>) attributes {dimension_semantics = [#tpu.dimension_semantics<parallel>], iteration_bounds = array<i64: 1>, scalar_prefetch = 0 : i64, scratch_operands = 0 : i64, tpu.core_type = #tpu.core_type<tc>, window_params = [{transform_indices = @transform_0, window_bounds = array<i64: 16, 32>}, {pipeline_mode = #tpu.pipeline_mode<synchronous>, transform_indices = @transform_1, window_bounds = array<i64: 32, 256>}, {pipeline_mode = #tpu.pipeline_mode<synchronous>, transform_indices = @transform_2, window_bounds = array<i64: 256, 32>}, {pipeline_mode = #tpu.pipeline_mode<synchronous>, transform_indices = @transform_3, window_bounds = array<i64: 1, 256>}, {transform_indices = @transform_4, window_bounds = array<i64: 16, 32>}]} {
    %c0 = arith.constant 0 : index
    %c0_0 = arith.constant 0 : index
    %0 = vector.load %arg1[%c0, %c0_0] : memref<16x32xf32, #tpu.memory_space<vmem>>, vector<16x32xf32>
    %1 = arith.truncf %0 : vector<16x32xf32> to vector<16x32xbf16>
    %c0_1 = arith.constant 0 : index
    %c0_2 = arith.constant 0 : index
    %2 = vector.load %arg2[%c0_1, %c0_2] : memref<32x256xbf16, #tpu.memory_space<vmem>>, vector<32x256xbf16>
    %cst = arith.constant dense<0.000000e+00> : vector<16x256xf32>
    %3 = tpu.matmul %1, %2, %cst {dimension_numbers = #tpu.dot_dimension_numbers<[1], [0], [0], [1], [0, 0, 1, 1], [], []>} : vector<16x32xbf16>, vector<32x256xbf16>, vector<16x256xf32> -> vector<16x256xf32>
    %4 = vector.extract_strided_slice %3 {offsets = [0, 0], sizes = [16, 128], strides = [1, 1]} : vector<16x256xf32> to vector<16x128xf32>
    %5 = vector.extract_strided_slice %3 {offsets = [0, 128], sizes = [16, 128], strides = [1, 1]} : vector<16x256xf32> to vector<16x128xf32>
    %6 = arith.mulf %4, %4 : vector<16x128xf32>
    %7 = arith.mulf %5, %5 : vector<16x128xf32>
    %8 = arith.addf %6, %7 : vector<16x128xf32>
    %9 = tpu.iota {dimensions = array<i32: 0>} : vector<16x128xi32>
    %c0_i32 = arith.constant 0 : i32
    %10 = vector.broadcast %c0_i32 : i32 to vector<16x128xi32>
    %11 = arith.cmpi eq, %9, %10 : vector<16x128xi32>
    %c0_i32_3 = arith.constant 0 : i32
    %12 = arith.cmpi eq, %arg0, %c0_i32_3 : i32
    %13 = vector.broadcast %12 : i1 to vector<16x128xi1>
    %14 = arith.andi %11, %13 : vector<16x128xi1>
    %cst_4 = arith.constant 0.000000e+00 : f32
    %15 = vector.broadcast %cst_4 : f32 to vector<16x128xf32>
    %16 = arith.select %14, %15, %8 : vector<16x128xi1>, vector<16x128xf32>
    %cst_5 = arith.constant 0.000000e+00 : f32
    %17 = vector.broadcast %cst_5 : f32 to vector<16x128xf32>
    %18 = arith.cmpf ogt, %16, %17 : vector<16x128xf32>
    %19 = arith.extui %18 : vector<16x128xi1> to vector<16x128xi32>
    %20 = arith.sitofp %19 : vector<16x128xi32> to vector<16x128xf32>
    %21 = tpu.concatenate %20, %20 in 1 : vector<16x128xf32>, vector<16x128xf32> -> vector<16x256xf32>
    %c0_6 = arith.constant 0 : index
    %c0_7 = arith.constant 0 : index
    %22 = vector.load %arg4[%c0_6, %c0_7] : memref<1x256xf32, #tpu.memory_space<vmem>>, vector<1x256xf32>
    %23 = vector.broadcast %22 : vector<1x256xf32> to vector<16x256xf32>
    %24 = arith.mulf %21, %23 : vector<16x256xf32>
    %25 = arith.mulf %3, %24 : vector<16x256xf32>
    %26 = arith.truncf %25 : vector<16x256xf32> to vector<16x256xbf16>
    %c0_8 = arith.constant 0 : index
    %c0_9 = arith.constant 0 : index
    %27 = vector.load %arg3[%c0_8, %c0_9] : memref<256x32xbf16, #tpu.memory_space<vmem>>, vector<256x32xbf16>
    %cst_10 = arith.constant dense<0.000000e+00> : vector<16x32xf32>
    %28 = tpu.matmul %26, %27, %cst_10 {dimension_numbers = #tpu.dot_dimension_numbers<[1], [0], [0], [1], [0, 0, 1, 1], [], []>} : vector<16x256xbf16>, vector<256x32xbf16>, vector<16x32xf32> -> vector<16x32xf32>
    %29 = arith.subf %0, %28 : vector<16x32xf32>
    %30 = arith.addf %0, %28 : vector<16x32xf32>
    %31 = arith.addf %30, %29 : vector<16x32xf32>
    %c0_11 = arith.constant 0 : index
    %c0_12 = arith.constant 0 : index
    %32 = vector.load %arg5[%c0_11, %c0_12] : memref<16x32xf32, #tpu.memory_space<vmem>>, vector<16x32xf32>
    tpu.vector_store %arg5[%c0_11, %c0_12], %31 {strides = array<i32>} : memref<16x32xf32, #tpu.memory_space<vmem>>, vector<16x32xf32>,
    return
  }
  func.func @transform_0(%arg0: i32) -> (i32, i32) {
    %c0_i32 = arith.constant 0 : i32
    %c0_i32_0 = arith.constant 0 : i32
    return %arg0, %c0_i32 : i32, i32
  }
  func.func @transform_1(%arg0: i32) -> (i32, i32) {
    %c0_i32 = arith.constant 0 : i32
    %c0_i32_0 = arith.constant 0 : i32
    %c0_i32_1 = arith.constant 0 : i32
    return %c0_i32, %c0_i32_0 : i32, i32
  }
  func.func @transform_2(%arg0: i32) -> (i32, i32) {
    %c0_i32 = arith.constant 0 : i32
    %c0_i32_0 = arith.constant 0 : i32
    %c0_i32_1 = arith.constant 0 : i32
    return %c0_i32, %c0_i32_0 : i32, i32
  }
  func.func @transform_3(%arg0: i32) -> (i32, i32) {
    %c0_i32 = arith.constant 0 : i32
    %c0_i32_0 = arith.constant 0 : i32
    %c0_i32_1 = arith.constant 0 : i32
    return %c0_i32, %c0_i32_0 : i32, i32
  }
  func.func @transform_4(%arg0: i32) -> (i32, i32) {
    %c0_i32 = arith.constant 0 : i32
    %c0_i32_0 = arith.constant 0 : i32
    return %arg0, %c0_i32 : i32, i32
  }
}

</mosaic_0001>

<llo_original>
// kernel: tpu_custom_call.1
$region0: #{tpu_custom_call.1}
  #allocation0 [shape = 'u32[]', space=smem, size = 0x4, offset = 0x4, fixed_abs, tag = 'smem constant byte address 0x4 - core index']
  #allocation1 [shape = 'u32[144,128]{1,0:T(1,128)}', space=vmem, size = 0x12000, scoped, tag = 'internal scratch']
  %s0 = inlined_call_operand.vmem [shape: f32[16,32], index: 0, kind: input, shape index: {}]
  %s1 = inlined_call_operand.vmem [shape: bf16[32,256], index: 1, kind: input, shape index: {}]
  %s2 = inlined_call_operand.vmem [shape: bf16[256,32], index: 2, kind: input, shape index: {}]
  %s3 = inlined_call_operand.vmem [shape: f32[1,256], index: 3, kind: input, shape index: {}]
  %s4 = inlined_call_operand.hbm [shape: f32[16,32], index: 4, kind: output, shape index: {}]
  %s5 = sld [smem:[#allocation0]]
  $region26: #{tpu_custom_call.1} parent=0
    _
  %s7 = ssub.s32 1, %s5
  %s8 = scalar_select 0, %s7, %s5
  $region1: #{tpu_custom_call.1} parent=0
    #allocation2 [shape = 'u8[8192]{0}', space=vmem, size = 0x2000, scoped, tag = 'output window, operand 0, single buffered']
    #allocation3 [shape = 's32[1]{0}', space=sflag, size = 0x4, scoped, tag = 'scoped memory for tpu_custom_call.1']
    %9 = vsyncpa [#allocation3], 0
    // Predicated region
    $region2: #{tpu_custom_call.1} parent=1 // pred_check
      _
    $region3: #{tpu_custom_call.1} parent=1 // pred_check_branch
      %11 = sbr.rel (0) target = $region5
    $region4: #{tpu_custom_call.1} parent=1 // pred_region
      _
    $region5: #{tpu_custom_call.1} parent=1 // pred_fallthru
      _
    // Predicated region
    $region6: #{tpu_custom_call.1} parent=1 // pred_check
      _
    $region7: #{tpu_custom_call.1} parent=1 // pred_check_branch
      %13 = sbr.rel (0) target = $region9
    $region8: #{tpu_custom_call.1} parent=1 // pred_region
      _
    $region9: #{tpu_custom_call.1} parent=1 // pred_fallthru
      _
    // Predicated region
    $region10: #{tpu_custom_call.1} parent=1 // pred_check
      _
    $region11: #{tpu_custom_call.1} parent=1 // pred_check_branch
      %15 = sbr.rel (0) target = $region13
    $region12: #{tpu_custom_call.1} parent=1 // pred_region
      _
    $region13: #{tpu_custom_call.1} parent=1 // pred_fallthru
      _
    // Predicated region
    $region14: #{tpu_custom_call.1} parent=1 // pred_check
      _
    $region15: #{tpu_custom_call.1} parent=1 // pred_check_branch
      %17 = sbr.rel (0) target = $region17
    $region16: #{tpu_custom_call.1} parent=1 // pred_region
      _
    $region17: #{tpu_custom_call.1} parent=1 // pred_fallthru
      _
    %v19 = vld [vmem:[%s0] sm:$0xff]
    %v20 = vld [vmem:[%s0 + $0x8] sm:$0xff]
    %v21 = vpack.c.bf16 %v20, %v19
    %v22 = vld [vmem:[%s1] sm:$0xff]
    %v23 = vld [vmem:[%s1 + $0x8] sm:$0xff]
    %v24 = vld [vmem:[%s1 + $0x10] sm:$0xff]
    %v25 = vld [vmem:[%s1 + $0x18] sm:$0xff]
    %v30 = vunpack.c.l.b16 %v22
    %v31 = vunpack.c.h.b16 %v22
    %v32 = vunpack.c.l.b16 %v23
    %v33 = vunpack.c.h.b16 %v23
    %v34 = vunpack.c.l.b16 %v24
    %v35 = vunpack.c.h.b16 %v24
    %v36 = vunpack.c.l.b16 %v25
    %v37 = vunpack.c.h.b16 %v25
    %v38 = vpack.c.b16 %v32, %v30
    %v39 = vpack.c.b16 %v33, %v31
    %v40 = vpack.c.b16 %v36, %v34
    %v41 = vpack.c.b16 %v37, %v35
    %vm46 = vcmask 261120
    %v48 = vsel %vm46, %v21, 0
    %50 = vmatprep.subr.bf16.mxu0 %v39
    %51 = vmatpush1.bf16.msra.mxu0 %v38
    %52 = vmatprep.subr.bf16.mxu0 %v41
    %53 = vmatpush1.bf16.msra.mxu0 %v40
    %54 = vmatprep.subr.bf16.mxu0 0
    %55 = vmatpush1.bf16.msra.mxu0 0
    %56 = vmatprep.subr.bf16.mxu0 0
    %57 = vmatpush1.bf16.msra.mxu0 0
    %58 = vmatprep.subr.bf16.mxu0 0
    %59 = vmatpush1.bf16.msra.mxu0 0
    %60 = vmatprep.subr.bf16.mxu0 0
    %61 = vmatpush1.bf16.msra.mxu0 0
    %62 = vmatprep.subr.bf16.mxu0 0
    %63 = vmatpush1.bf16.msra.mxu0 0
    %64 = vmatprep.subr.bf16.mxu0 0
    %65 = vmatpush1.bf16.msra.mxu0 0
    %66 = vmatprep.subr.bf16.mxu0 0
    %67 = vmatpush1.bf16.msra.mxu0 0
    %68 = vmatprep.subr.bf16.mxu0 0
    %69 = vmatpush1.bf16.msra.mxu0 0
    %70 = vmatprep.subr.bf16.mxu0 0
    %71 = vmatpush1.bf16.msra.mxu0 0
    %72 = vmatprep.subr.bf16.mxu0 0
    %73 = vmatpush1.bf16.msra.mxu0 0
    %74 = vmatprep.subr.bf16.mxu0 0
    %75 = vmatpush1.bf16.msra.mxu0 0
    %76 = vmatprep.subr.bf16.mxu0 0
    %77 = vmatpush1.bf16.msra.mxu0 0
    %78 = vmatprep.subr.bf16.mxu0 0
    %79 = vmatpush1.bf16.msra.mxu0 0
    %80 = vmatprep.subr.bf16.mxu0 0
    %81 = vmatpush1.bf16.msra.mxu0 0
    %82 = vmatprep.mubr.bf16.mxu0 0
    %83 = vmatmul.mubr.bf16.gmra.mrb[0].mxu0 %v48
    %v84 = vpop.f32.mrb[0].mxu0
    %v85 = vadd.f32 0.0, %v84
    %v86 = vpop.f32.mrb[0].mxu0
    %v87 = vadd.f32 0.0, %v86
    %v88 = vpop.f32.mrb[0].mxu0
    %v89 = vadd.f32 0.0, %v88
    %v90 = vpop.f32.mrb[0].mxu0
    %v91 = vadd.f32 0.0, %v90
    %92 = vdwg.mxu0
    %v93 = vmul.f32 %v85, %v85
    %v94 = vmul.f32 %v89, %v89
    %v95 = vmul.f32 %v87, %v87
    %v96 = vmul.f32 %v91, %v91
    %v97 = vadd.f32 %v93, %v95
    %v98 = vadd.f32 %v94, %v96
    %v99 = vlaneseq
    %v100 = vshrl.u32 %v99, 7
    %v101 = vadd.s32 %v100, 8
    %vm102 = vcmp.eq.s32.totalorder %v100, 0
    %vm103 = vcmp.eq.s32.totalorder %v101, 0
    %p104 = scmp.eq.s32.totalorder 0, 0
    %s105 = scalar_select %p104, 1, 0
    %v106 = vstv %s105
    %vm107 = vcmp.eq.s32.totalorder %v106, 1
    %vm108 = vmand %vm102, %vm107
    %vm109 = vmand %vm103, %vm107
    %v110 = vsel %vm108, 0.0, %v97
    %v111 = vsel %vm109, 0.0, %v98
    %vm112 = vcmp.gt.f32.partialorder %v110, 0.0
    %vm113 = vcmp.gt.f32.partialorder %v111, 0.0
    %v114 = vsel %vm112, 1, 0
    %v115 = vsel %vm113, 1, 0
    %v116 = vcvt.s32.f32 %v114
    %v117 = vcvt.s32.f32 %v115
    %v118 = vld [vmem:[%s3] sm:$0x3]
    %v120 = vlaneseq
    %v121 = vshrl.u32 %v120, 7
    %v122 = vsub.s32 0, %v121
    %v123 = vrot.slane %v118, %v122
    %v124 = vlaneseq
    %v125 = vshrl.u32 %v124, 7
    %v126 = vsub.s32 1, %v125
    %v127 = vrot.slane %v118, %v126
    %v130 = vmul.f32 %v116, %v123
    %v131 = vmul.f32 %v116, %v127
    %v132 = vmul.f32 %v117, %v123
    %v133 = vmul.f32 %v117, %v127
    %v134 = vmul.f32 %v85, %v130
    %v135 = vmul.f32 %v87, %v131
    %v136 = vmul.f32 %v89, %v132
    %v137 = vmul.f32 %v91, %v133
    %v138 = vpack.c.bf16 %v136, %v134
    %v139 = vpack.c.bf16 %v137, %v135
    %v140 = vld [vmem:[%s2] sm:$0xf]
    %v141 = vld [vmem:[%s2 + $0x4] sm:$0xf]
    %v142 = vld [vmem:[%s2 + $0x8] sm:$0xf]
    %v143 = vld [vmem:[%s2 + $0xc] sm:$0xf]
    %v144 = vld [vmem:[%s2 + $0x10] sm:$0xf]
    %v145 = vld [vmem:[%s2 + $0x14] sm:$0xf]
    %v146 = vld [vmem:[%s2 + $0x18] sm:$0xf]
    %v147 = vld [vmem:[%s2 + $0x1c] sm:$0xf]
    %v148 = vld [vmem:[%s2 + $0x20] sm:$0xf]
    %v149 = vld [vmem:[%s2 + $0x24] sm:$0xf]
    %v150 = vld [vmem:[%s2 + $0x28] sm:$0xf]
    %v151 = vld [vmem:[%s2 + $0x2c] sm:$0xf]
    %v152 = vld [vmem:[%s2 + $0x30] sm:$0xf]
    %v153 = vld [vmem:[%s2 + $0x34] sm:$0xf]
    %v154 = vld [vmem:[%s2 + $0x38] sm:$0xf]
    %v155 = vld [vmem:[%s2 + $0x3c] sm:$0xf]
    %v156 = vld [vmem:[%s2 + $0x40] sm:$0xf]
    %v157 = vld [vmem:[%s2 + $0x44] sm:$0xf]
    %v158 = vld [vmem:[%s2 + $0x48] sm:$0xf]
    %v159 = vld [vmem:[%s2 + $0x4c] sm:$0xf]
    %v160 = vld [vmem:[%s2 + $0x50] sm:$0xf]
    %v161 = vld [vmem:[%s2 + $0x54] sm:$0xf]
    %v162 = vld [vmem:[%s2 + $0x58] sm:$0xf]
    %v163 = vld [vmem:[%s2 + $0x5c] sm:$0xf]
    %v164 = vld [vmem:[%s2 + $0x60] sm:$0xf]
    %v165 = vld [vmem:[%s2 + $0x64] sm:$0xf]
    %v166 = vld [vmem:[%s2 + $0x68] sm:$0xf]
    %v167 = vld [vmem:[%s2 + $0x6c] sm:$0xf]
    %v168 = vld [vmem:[%s2 + $0x70] sm:$0xf]
    %v169 = vld [vmem:[%s2 + $0x74] sm:$0xf]
    %v170 = vld [vmem:[%s2 + $0x78] sm:$0xf]
    %v171 = vld [vmem:[%s2 + $0x7c] sm:$0xf]
    %v204 = vunpack.c.l.b16 %v140
    %v205 = vunpack.c.l.b16 %v141
    %v206 = vunpack.c.l.b16 %v142
    %v207 = vunpack.c.l.b16 %v143
    %v208 = vunpack.c.l.b16 %v144
    %v209 = vunpack.c.l.b16 %v145
    %v210 = vunpack.c.l.b16 %v146
    %v211 = vunpack.c.l.b16 %v147
    %v212 = vunpack.c.l.b16 %v148
    %v213 = vunpack.c.l.b16 %v149
    %v214 = vunpack.c.l.b16 %v150
    %v215 = vunpack.c.l.b16 %v151
    %v216 = vunpack.c.l.b16 %v152
    %v217 = vunpack.c.l.b16 %v153
    %v218 = vunpack.c.l.b16 %v154
    %v219 = vunpack.c.l.b16 %v155
    %v220 = vunpack.c.l.b16 %v156
    %v221 = vunpack.c.l.b16 %v157
    %v222 = vunpack.c.l.b16 %v158
    %v223 = vunpack.c.l.b16 %v159
    %v224 = vunpack.c.l.b16 %v160
    %v225 = vunpack.c.l.b16 %v161
    %v226 = vunpack.c.l.b16 %v162
    %v227 = vunpack.c.l.b16 %v163
    %v228 = vunpack.c.l.b16 %v164
    %v229 = vunpack.c.l.b16 %v165
    %v230 = vunpack.c.l.b16 %v166
    %v231 = vunpack.c.l.b16 %v167
    %v232 = vunpack.c.l.b16 %v168
    %v233 = vunpack.c.l.b16 %v169
    %v234 = vunpack.c.l.b16 %v170
    %v235 = vunpack.c.l.b16 %v171
    %v236 = vpack.c.b16 %v205, %v204
    %v237 = vpack.c.b16 %v207, %v206
    %v238 = vpack.c.b16 %v209, %v208
    %v239 = vpack.c.b16 %v211, %v210
    %v240 = vpack.c.b16 %v213, %v212
    %v241 = vpack.c.b16 %v215, %v214
    %v242 = vpack.c.b16 %v217, %v216
    %v243 = vpack.c.b16 %v219, %v218
    %v244 = vpack.c.b16 %v221, %v220
    %v245 = vpack.c.b16 %v223, %v222
    %v246 = vpack.c.b16 %v225, %v224
    %v247 = vpack.c.b16 %v227, %v226
    %v248 = vpack.c.b16 %v229, %v228
    %v249 = vpack.c.b16 %v231, %v230
    %v250 = vpack.c.b16 %v233, %v232
    %v251 = vpack.c.b16 %v235, %v234
    %268 = vmatprep.subr.bf16.mxu0 0
    %269 = vmatpush1.bf16.msra.mxu0 %v236
    %270 = vmatprep.subr.bf16.mxu0 0
    %271 = vmatpush1.bf16.msra.mxu0 %v237
    %272 = vmatprep.subr.bf16.mxu0 0
    %273 = vmatpush1.bf16.msra.mxu0 %v238
    %274 = vmatprep.subr.bf16.mxu0 0
    %275 = vmatpush1.bf16.msra.mxu0 %v239
    %276 = vmatprep.subr.bf16.mxu0 0
    %277 = vmatpush1.bf16.msra.mxu0 %v240
    %278 = vmatprep.subr.bf16.mxu0 0
    %279 = vmatpush1.bf16.msra.mxu0 %v241
    %280 = vmatprep.subr.bf16.mxu0 0
    %281 = vmatpush1.bf16.msra.mxu0 %v242
    %282 = vmatprep.subr.bf16.mxu0 0
    %283 = vmatpush1.bf16.msra.mxu0 %v243
    %284 = vmatprep.subr.bf16.mxu0 0
    %285 = vmatpush1.bf16.msra.mxu0 %v244
    %286 = vmatprep.subr.bf16.mxu0 0
    %287 = vmatpush1.bf16.msra.mxu0 %v245
    %288 = vmatprep.subr.bf16.mxu0 0
    %289 = vmatpush1.bf16.msra.mxu0 %v246
    %290 = vmatprep.subr.bf16.mxu0 0
    %291 = vmatpush1.bf16.msra.mxu0 %v247
    %292 = vmatprep.subr.bf16.mxu0 0
    %293 = vmatpush1.bf16.msra.mxu0 %v248
    %294 = vmatprep.subr.bf16.mxu0 0
    %295 = vmatpush1.bf16.msra.mxu0 %v249
    %296 = vmatprep.subr.bf16.mxu0 0
    %297 = vmatpush1.bf16.msra.mxu0 %v250
    %298 = vmatprep.subr.bf16.mxu0 0
    %299 = vmatpush1.bf16.msra.mxu0 %v251
    %300 = vmatprep.mubr.bf16.mxu0 %v139
    %301 = vmatmul.mubr.bf16.gmra.mrb[0].mxu0 %v138
    %v302 = vpop.f32.mrb[0].mxu0
    %v303 = vadd.f32 0.0, %v302
    %v304 = vpop.f32.mrb[0].mxu0
    %v305 = vpop.f32.mrb[0].mxu0
    %v306 = vadd.f32 0.0, %v305
    %v307 = vpop.f32.mrb[0].mxu0
    %308 = vdwg.mxu0
    %v309 = vsub.f32 %v19, %v303
    %v310 = vsub.f32 %v20, %v306
    %v311 = vadd.f32 %v19, %v303
    %v312 = vadd.f32 %v20, %v306
    %v313 = vadd.f32 %v311, %v309
    %v314 = vadd.f32 %v312, %v310
    %315 = vst.msk [vmem:[#allocation2] sm:$0xff] %vm46, %v313
    %316 = vst.msk [vmem:[#allocation2 + $0x8] sm:$0xff] %vm46, %v314
    // Predicated region
    $region18: #{tpu_custom_call.1} parent=1 // pred_check
      _
    $region19: #{tpu_custom_call.1} parent=1 // pred_check_branch
      %318 = sbr.rel (0) target = $region21
    $region20: #{tpu_custom_call.1} parent=1 // pred_region
      %s320 = ssub.s32 256, 256
      %321 = vsyncadd [#allocation3], %s320
      %s322 = sshll.u32 [#allocation2], 4
      %s323 = int_to_ptr.vmem [resolvable:$true] %s322
      %328 = dma.vmem_to_hbm [thread:$0]  %s323, 256, %s4, [#allocation3], 128, 128, 8
    $region21: #{tpu_custom_call.1} parent=1 // pred_fallthru
      _
    // Predicated region
    $region22: #{tpu_custom_call.1} parent=1 // pred_check
      _
    $region23: #{tpu_custom_call.1} parent=1 // pred_check_branch
      %330 = sbr.rel (0) target = $region25
    $region24: #{tpu_custom_call.1} parent=1 // pred_region
      %331 = dma.done [#allocation3], 256
    $region25: #{tpu_custom_call.1} parent=1 // pred_fallthru
      _
    %332 = vsyncpa [#allocation3], 1

</llo_original>
